<compile_context>
chip_gen: v5e
topology: v5e:2x2
jax: 0.10.0
libtpu: 0.0.40
codegen_flags: <defaults>
</compile_context>

<pallas_src>
import jax
import jax.numpy as jnp
from jax.experimental import pallas as pl
from jax.experimental.pallas import tpu as pltpu


def _round_up(x, m):
    return ((x + m - 1) // m) * m


def _nll_partials_kernel(pred_ref, target_ref, weight_ref, num_ref, den_ref):
    pred = pred_ref[...]     # (TILE_N, C) f32 log-probabilities
    tgt = target_ref[...]    # (TILE_N, 1) i32 class ids (-1 marks padding rows)
    w = weight_ref[...]      # (1, C)      f32 per-class weights

    # One-hot mask via lane iota + lane-broadcast compare (idiomatic TPU gather
    # replacement).  Padding rows (tgt == -1) never match -> contribute 0.
    class_ids = jax.lax.broadcasted_iota(jnp.int32, pred.shape, 1)   # (TILE_N, C)
    mask = class_ids == tgt                                          # (TILE_N, C) bool
    wb = jnp.broadcast_to(w, pred.shape)                             # single hoisted broadcast

    # Fused masked reductions: no (N,1) intermediates, half the multiplies.
    num = -jnp.sum(jnp.where(mask, pred * wb, 0.0))   # sum_i w[t_i] * (-logp[i, t_i])
    den = jnp.sum(jnp.where(mask, wb, 0.0))           # sum_i w[t_i]

    num_ref[...] = jnp.reshape(num, (1, 1, 1))
    den_ref[...] = jnp.reshape(den, (1, 1, 1))


def get_loss(pred, target, trans_feat, weight, *, tile_n=512):
    """Pallas equivalent of the PyTorch get_loss.forward.

    pred:       (N, C) float32 log-probabilities
    target:     (N,)   integer class indices
    trans_feat: unused (interface fidelity with the PyTorch module)
    weight:     (C,)   float32 per-class weights
    """
    del trans_feat  # unused, as in the reference module
    N, C = pred.shape
    pred = pred.astype(jnp.float32)
    target = target.astype(jnp.int32)
    weight2d = weight.astype(jnp.float32).reshape(1, C)

    # Generation-safe tile: 512 rows keeps the double-buffered working set far
    # below every scoped-VMEM default (v5e 16 MiB / v6e 32 MiB / v7x 32 MiB)
    # while being large enough to sit near the HBM roofline.
    tile_n = min(tile_n, _round_up(N, 8))
    n_pad = _round_up(N, tile_n)
    if n_pad != N:
        pred = jnp.pad(pred, ((0, n_pad - N), (0, 0)))
        target = jnp.pad(target, (0, n_pad - N), constant_values=-1)
    target2d = target.reshape(n_pad, 1)
    grid_n = n_pad // tile_n

    # TODO(synk): lane-dense repacking for C << 128 (pack 128//C samples per
    # vreg row) would cut VMEM/DMA lane padding ~128/C x; kept generic here.
    # TODO(synk): PyTorch's ignore_index=-100 is not replicated; out-of-range
    # targets simply contribute 0 to both sums (never exercised by the module).
    num_p, den_p = pl.pallas_call(
        _nll_partials_kernel,
        out_shape=(
            jax.ShapeDtypeStruct((grid_n, 1, 1), jnp.float32),
            jax.ShapeDtypeStruct((grid_n, 1, 1), jnp.float32),
        ),
        grid=(grid_n,),
        in_specs=[
            pl.BlockSpec((tile_n, C), lambda i: (i, 0)),
            pl.BlockSpec((tile_n, 1), lambda i: (i, 0)),
            pl.BlockSpec((1, C), lambda i: (0, 0)),
        ],
        out_specs=(
            pl.BlockSpec((1, 1, 1), lambda i: (i, 0, 0)),
            pl.BlockSpec((1, 1, 1), lambda i: (i, 0, 0)),
        ),
        compiler_params=pltpu.CompilerParams(
            dimension_semantics=("parallel",),
            vmem_limit_bytes=32 * 1024 * 1024,
        ),
        cost_estimate=pl.CostEstimate(
            flops=4 * n_pad * C,
            transcendentals=0,
            bytes_accessed=n_pad * C * 4 + n_pad * 4 + C * 4 + grid_n * 8,
        ),
    )(pred, target2d, weight2d)

    # Tiny partials reduce + exact divide in JAX (reduction='mean' with weights).
    return jnp.sum(num_p) / jnp.sum(den_p)


def _reference_nll_loss(pred, target, weight):
    # Pure-JAX reference of torch.nn.functional.nll_loss(pred, target, weight=weight)
    picked = pred[jnp.arange(pred.shape[0]), target]        # (N,)
    w = weight[target]                                      # (N,)
    return jnp.sum(-w * picked) / jnp.sum(w)


if __name__ == "__main__":
    key = jax.random.PRNGKey(0)

    def run_case(case_key, N, C):
        k1, k2, k3, k4 = jax.random.split(case_key, 4)
        logits = jax.random.normal(k1, (N, C), dtype=jnp.float32)
        pred = jax.nn.log_softmax(logits, axis=-1)   # nll_loss expects log-probs
        target = jax.random.randint(k2, (N,), 0, C, dtype=jnp.int32)
        trans_feat = jax.random.normal(k3, (N, 3, 3), dtype=jnp.float32)  # unused
        weight = jax.random.uniform(k4, (C,), dtype=jnp.float32,
                                    minval=0.5, maxval=1.5)

        loss = jax.block_until_ready(get_loss(pred, target, trans_feat, weight))
        ref = _reference_nll_loss(pred, target, weight)
        assert jnp.allclose(loss, ref, rtol=1e-4, atol=1e-5), (N, C, loss, ref)

    k_small, k_big = jax.random.split(key)
    run_case(k_small, N=8, C=16)      # single-tile path (matches module's tiny test)
    run_case(k_big, N=1000, C=16)     # multi-tile, padded path (exercises the grid pipeline)

    print("KERNEL_OK")
</pallas_src>

<mosaic_0001>
module attributes {stable_mosaic.version = 11 : i64} {
  func.func @_nll_partials_kernel(%arg0: i32, %arg1: memref<8x16xf32, #tpu.memory_space<vmem>>, %arg2: memref<8x1xi32, #tpu.memory_space<vmem>>, %arg3: memref<1x16xf32, #tpu.memory_space<vmem>>, %arg4: memref<1x1x1xf32, #tpu.memory_space<vmem>>, %arg5: memref<1x1x1xf32, #tpu.memory_space<vmem>>) attributes {dimension_semantics = [#tpu.dimension_semantics<parallel>], iteration_bounds = array<i64: 1>, scalar_prefetch = 0 : i64, scratch_operands = 0 : i64, tpu.core_type = #tpu.core_type<tc>, window_params = [{transform_indices = @transform_0, window_bounds = array<i64: 8, 16>}, {transform_indices = @transform_1, window_bounds = array<i64: 8, 1>}, {pipeline_mode = #tpu.pipeline_mode<synchronous>, transform_indices = @transform_2, window_bounds = array<i64: 1, 16>}, {transform_indices = @transform_3, window_bounds = array<i64: 1, 1, 1>}, {transform_indices = @transform_4, window_bounds = array<i64: 1, 1, 1>}]} {
    %c0 = arith.constant 0 : index
    %c0_0 = arith.constant 0 : index
    %0 = vector.load %arg1[%c0, %c0_0] : memref<8x16xf32, #tpu.memory_space<vmem>>, vector<8x16xf32>
    %c0_1 = arith.constant 0 : index
    %c0_2 = arith.constant 0 : index
    %1 = vector.load %arg2[%c0_1, %c0_2] : memref<8x1xi32, #tpu.memory_space<vmem>>, vector<8x1xi32>
    %c0_3 = arith.constant 0 : index
    %c0_4 = arith.constant 0 : index
    %2 = vector.load %arg3[%c0_3, %c0_4] : memref<1x16xf32, #tpu.memory_space<vmem>>, vector<1x16xf32>
    %3 = tpu.iota {dimensions = array<i32: 1>} : vector<8x16xi32>
    %4 = vector.broadcast %1 : vector<8x1xi32> to vector<8x16xi32>
    %5 = arith.cmpi eq, %3, %4 : vector<8x16xi32>
    %6 = vector.shape_cast %2 : vector<1x16xf32> to vector<1x16xf32>
    %7 = vector.broadcast %6 : vector<1x16xf32> to vector<8x16xf32>
    %8 = arith.mulf %0, %7 : vector<8x16xf32>
    %cst = arith.constant 0.000000e+00 : f32
    %9 = vector.broadcast %cst : f32 to vector<8x16xf32>
    %10 = arith.select %5, %8, %9 : vector<8x16xi1>, vector<8x16xf32>
    %11 = vector.shape_cast %10 : vector<8x16xf32> to vector<1x8x16xf32>
    %cst_5 = arith.constant dense<0.000000e+00> : vector<1xf32>
    %12 = vector.multi_reduction <add>, %11, %cst_5 [1, 2] : vector<1x8x16xf32> to vector<1xf32>
    %13 = vector.shape_cast %12 : vector<1xf32> to vector<1x1x1xf32>
    %14 = vector.extract %13[0, 0, 0] : f32 from vector<1x1x1xf32>
    %cst_6 = arith.constant 0.000000e+00 : f32
    %15 = arith.subf %cst_6, %14 : f32
    %cst_7 = arith.constant 0.000000e+00 : f32
    %16 = vector.broadcast %cst_7 : f32 to vector<8x16xf32>
    %17 = arith.select %5, %7, %16 : vector<8x16xi1>, vector<8x16xf32>
    %18 = vector.shape_cast %17 : vector<8x16xf32> to vector<1x8x16xf32>
    %cst_8 = arith.constant dense<0.000000e+00> : vector<1xf32>
    %19 = vector.multi_reduction <add>, %18, %cst_8 [1, 2] : vector<1x8x16xf32> to vector<1xf32>
    %20 = vector.shape_cast %19 : vector<1xf32> to vector<1x1x1xf32>
    %21 = vector.extract %20[0, 0, 0] : f32 from vector<1x1x1xf32>
    %22 = vector.broadcast %15 : f32 to vector<1x1x1xf32>
    %c0_9 = arith.constant 0 : index
    %c0_10 = arith.constant 0 : index
    %c0_11 = arith.constant 0 : index
    %23 = vector.load %arg4[%c0_9, %c0_10, %c0_11] : memref<1x1x1xf32, #tpu.memory_space<vmem>>, vector<1x1x1xf32>
    tpu.vector_store %arg4[%c0_9, %c0_10, %c0_11], %22 {strides = array<i32>} : memref<1x1x1xf32, #tpu.memory_space<vmem>>, vector<1x1x1xf32>,
    %24 = vector.broadcast %21 : f32 to vector<1x1x1xf32>
    %c0_12 = arith.constant 0 : index
    %c0_13 = arith.constant 0 : index
    %c0_14 = arith.constant 0 : index
    %25 = vector.load %arg5[%c0_12, %c0_13, %c0_14] : memref<1x1x1xf32, #tpu.memory_space<vmem>>, vector<1x1x1xf32>
    tpu.vector_store %arg5[%c0_12, %c0_13, %c0_14], %24 {strides = array<i32>} : memref<1x1x1xf32, #tpu.memory_space<vmem>>, vector<1x1x1xf32>,
    return
  }
  func.func @transform_0(%arg0: i32) -> (i32, i32) {
    %c0_i32 = arith.constant 0 : i32
    %c0_i32_0 = arith.constant 0 : i32
    return %arg0, %c0_i32 : i32, i32
  }
  func.func @transform_1(%arg0: i32) -> (i32, i32) {
    %c0_i32 = arith.constant 0 : i32
    %c0_i32_0 = arith.constant 0 : i32
    return %arg0, %c0_i32 : i32, i32
  }
  func.func @transform_2(%arg0: i32) -> (i32, i32) {
    %c0_i32 = arith.constant 0 : i32
    %c0_i32_0 = arith.constant 0 : i32
    %c0_i32_1 = arith.constant 0 : i32
    return %c0_i32, %c0_i32_0 : i32, i32
  }
  func.func @transform_3(%arg0: i32) -> (i32, i32, i32) {
    %c0_i32 = arith.constant 0 : i32
    %c0_i32_0 = arith.constant 0 : i32
    %c0_i32_1 = arith.constant 0 : i32
    return %arg0, %c0_i32, %c0_i32_0 : i32, i32, i32
  }
  func.func @transform_4(%arg0: i32) -> (i32, i32, i32) {
    %c0_i32 = arith.constant 0 : i32
    %c0_i32_0 = arith.constant 0 : i32
    %c0_i32_1 = arith.constant 0 : i32
    return %arg0, %c0_i32, %c0_i32_0 : i32, i32, i32
  }
}

</mosaic_0001>

<llo_original>
// kernel: tpu_custom_call.1
$region0: #{tpu_custom_call.1}
  #allocation0 [shape = 'u32[]', space=smem, size = 0x4, offset = 0x4, fixed_abs, tag = 'smem constant byte address 0x4 - core index']
  #allocation1 [shape = 'u32[72,128]{1,0:T(1,128)}', space=vmem, size = 0x9000, scoped, tag = 'internal scratch']
  %s0 = inlined_call_operand.vmem [shape: f32[8,16], index: 0, kind: input, shape index: {}]
  %s1 = inlined_call_operand.vmem [shape: s32[8,1], index: 1, kind: input, shape index: {}]
  %s2 = inlined_call_operand.vmem [shape: f32[1,16], index: 2, kind: input, shape index: {}]
  %s3 = inlined_call_operand.hbm [shape: f32[1,1,1], index: 3, kind: output, shape index: {0}]
  %s4 = inlined_call_operand.hbm [shape: f32[1,1,1], index: 4, kind: output, shape index: {1}]
  %5 = xla_tuple %s3, %s4
  %s6 = sld [smem:[#allocation0]]
  $region30: #{tpu_custom_call.1} parent=0
    _
  %s8 = ssub.s32 1, %s6
  %s9 = scalar_select 0, %s8, %s6
  $region1: #{tpu_custom_call.1} parent=0
    #allocation2 [shape = 'u8[512]{0}', space=vmem, size = 0x400, scoped, tag = 'output window, operand 0, single buffered']
    #allocation3 [shape = 's32[1]{0}', space=sflag, size = 0x4, scoped, tag = 'scoped memory for tpu_custom_call.1']
    #allocation4 [shape = 'u8[512]{0}', space=vmem, size = 0x400, scoped, tag = 'output window, operand 1, single buffered']
    #allocation5 [shape = 's32[1]{0}', space=sflag, size = 0x4, scoped, tag = 'scoped memory for tpu_custom_call.1']
    %10 = vsyncpa [#allocation3], 0
    %11 = vsyncpa [#allocation5], 0
    // Predicated region
    $region2: #{tpu_custom_call.1} parent=1 // pred_check
      _
    $region3: #{tpu_custom_call.1} parent=1 // pred_check_branch
      %13 = sbr.rel (0) target = $region5
    $region4: #{tpu_custom_call.1} parent=1 // pred_region
      _
    $region5: #{tpu_custom_call.1} parent=1 // pred_fallthru
      _
    // Predicated region
    $region6: #{tpu_custom_call.1} parent=1 // pred_check
      _
    $region7: #{tpu_custom_call.1} parent=1 // pred_check_branch
      %15 = sbr.rel (0) target = $region9
    $region8: #{tpu_custom_call.1} parent=1 // pred_region
      _
    $region9: #{tpu_custom_call.1} parent=1 // pred_fallthru
      _
    // Predicated region
    $region10: #{tpu_custom_call.1} parent=1 // pred_check
      _
    $region11: #{tpu_custom_call.1} parent=1 // pred_check_branch
      %17 = sbr.rel (0) target = $region13
    $region12: #{tpu_custom_call.1} parent=1 // pred_region
      _
    $region13: #{tpu_custom_call.1} parent=1 // pred_fallthru
      _
    %v18 = vld [vmem:[%s0] sm:$0xff]
    %v19 = vld [vmem:[%s1] sm:$0xff]
    %v20 = vld [vmem:[%s2] sm:$0x1]
    %v21 = vlaneseq
    %v22 = vand.u32 %v21, 127
    %23 = vset.pattern.permute.xlu0 0
    %24 = vperm.xlu0 %23, %v19
    %v25 = vpop.permute.xlu0 %24
    %vm26 = vcmp.eq.s32.totalorder %v22, %v25
    %v28 = vperm.slane %v20, 0
    %v30 = vmul.f32 %v18, %v28
    %v31 = vsel %vm26, %v30, 0.0
    %vm32 = vcmask 130048
    %v33 = vsel %vm32, %v31, 0.0
    %34 = vadd.xlane.f32.xlu0 %v33
    %v35 = vpop.xlane.xlu0 %34
    %v36 = vrot.slane %v35, 4
    %v37 = vadd.f32 %v35, %v36
    %v38 = vrot.slane %v37, 2
    %v39 = vadd.f32 %v37, %v38
    %v40 = vrot.slane %v39, 1
    %v41 = vadd.f32 %v39, %v40
    %s42 = vtos %v41
    %s43 = ssub.f32 0.0, %s42
    %v44 = vsel %vm26, %v28, 0.0
    %v45 = vsel %vm32, %v44, 0.0
    %46 = vadd.xlane.f32.xlu0 %v45
    %v47 = vpop.xlane.xlu0 %46
    %v48 = vrot.slane %v47, 4
    %v49 = vadd.f32 %v47, %v48
    %v50 = vrot.slane %v49, 2
    %v51 = vadd.f32 %v49, %v50
    %v52 = vrot.slane %v51, 1
    %v53 = vadd.f32 %v51, %v52
    %s54 = vtos %v53
    %v55 = vstv %s43
    %vm56 = vcmask 0
    %57 = vst.msk [vmem:[#allocation2] sm:$0x1] %vm56, %v55
    %v58 = vstv %s54
    %59 = vst.msk [vmem:[#allocation4] sm:$0x1] %vm56, %v58
    // Predicated region
    $region14: #{tpu_custom_call.1} parent=1 // pred_check
      _
    $region15: #{tpu_custom_call.1} parent=1 // pred_check_branch
      %61 = sbr.rel (0) target = $region17
    $region16: #{tpu_custom_call.1} parent=1 // pred_region
      %63 = vsyncadd [#allocation3], 0
      %s65 = sshll.u32 [#allocation2], 4
      %s66 = int_to_ptr.vmem [resolvable:$true] %s65
      %s67 = sshll.u32 %s3, 4
      %s68 = int_to_ptr.hbm [resolvable:$true] %s67
      %70 = dma.vmem_to_hbm [thread:$0]  %s66, 16, %s68, [#allocation3]
    $region17: #{tpu_custom_call.1} parent=1 // pred_fallthru
      _
    // Predicated region
    $region18: #{tpu_custom_call.1} parent=1 // pred_check
      _
    $region19: #{tpu_custom_call.1} parent=1 // pred_check_branch
      %72 = sbr.rel (0) target = $region21
    $region20: #{tpu_custom_call.1} parent=1 // pred_region
      %74 = vsyncadd [#allocation5], 0
      %s76 = sshll.u32 [#allocation4], 4
      %s77 = int_to_ptr.vmem [resolvable:$true] %s76
      %s78 = sshll.u32 %s4, 4
      %s79 = int_to_ptr.hbm [resolvable:$true] %s78
      %81 = dma.vmem_to_hbm [thread:$0]  %s77, 16, %s79, [#allocation5]
    $region21: #{tpu_custom_call.1} parent=1 // pred_fallthru
      _
    // Predicated region
    $region22: #{tpu_custom_call.1} parent=1 // pred_check
      _
    $region23: #{tpu_custom_call.1} parent=1 // pred_check_branch
      %83 = sbr.rel (0) target = $region25
    $region24: #{tpu_custom_call.1} parent=1 // pred_region
      %85 = dma.done [#allocation3], 16
    $region25: #{tpu_custom_call.1} parent=1 // pred_fallthru
      _
    // Predicated region
    $region26: #{tpu_custom_call.1} parent=1 // pred_check
      _
    $region27: #{tpu_custom_call.1} parent=1 // pred_check_branch
      %87 = sbr.rel (0) target = $region29
    $region28: #{tpu_custom_call.1} parent=1 // pred_region
      %89 = dma.done [#allocation5], 16
    $region29: #{tpu_custom_call.1} parent=1 // pred_fallthru
      _
    %90 = vsyncpa [#allocation3], 1
    %91 = vsyncpa [#allocation5], 1

</llo_original>
